<compile_context>
chip_gen: v7x
topology: tpu7x:2x2x1
jax: 0.10.0
libtpu: 0.0.40
codegen_flags: <defaults>
</compile_context>

<pallas_src>
import functools

import jax
import jax.numpy as jnp
from jax.experimental import pallas as pl
from jax.experimental.pallas import tpu as pltpu


def _make_fused_icm_kernel(H, W, C, K, P):
    """Kernel for one batch element of one ICM level (edge + sal fused)."""
    HW = H * W

    def kernel(x_ref, o_ref, we_ref, ws_ref, be_ref, bs_ref, m_ref,
               edge_ref, sal_ref):
        x = x_ref[0].astype(jnp.float32)     # (C, HW), lane dim = HW
        o = o_ref[0].astype(jnp.float32)     # (C, HW)
        masks = m_ref[...]                   # (K*K, HW) {0,1} border masks

        def branch(z, w_ref, b_ref, out_ref):
            # im2col patches via static lane rolls + masks (no padded scratch).
            chunks = []
            for kh in range(K):
                for kw in range(K):
                    d = (kh - P) * W + (kw - P)      # flattened tap offset
                    sh = (-d) % HW                   # static lane roll amount
                    shifted = pltpu.roll(z, shift=sh, axis=1) if sh else z
                    m = masks[kh * K + kw:kh * K + kw + 1, :]   # (1, HW)
                    chunks.append(shifted * m)                  # (C, HW)
            patches = jnp.concatenate(chunks, axis=0)           # (K*K*C, HW)
            # Single MXU matmul; output minor dim HW is a multiple of 128.
            y = jnp.dot(w_ref[...], patches,
                        preferred_element_type=jnp.float32)     # (Cout, HW)
            y = y + b_ref[...]            # folded conv-bias + BN shift (C, 1)
            out_ref[0] = jnp.maximum(y, 0.0).astype(out_ref.dtype)

        branch(x * o, we_ref, be_ref, edge_ref)   # edge branch
        branch(x + o, ws_ref, bs_ref, sal_ref)    # sal  branch

    return kernel


@functools.partial(jax.jit, static_argnames=("ksize", "padding"))
def icm_level(x_nchw, o_nchw, w_edge, w_sal, b_edge, b_sal, *, ksize, padding):
    """One ICM level (both branches fused in a single pallas_call).

    x_nchw, o_nchw : (B, C, H, W)  convs_i, outs_i (NCHW, ingested directly)
    w_edge, w_sal  : (C, K*K*C)    im2col conv weights (BN scale folded in)
    b_edge, b_sal  : (C, 1)        folded conv-bias + BN shift
    Returns (edge, sal) in NCHW.
    """
    B, C, H, W = x_nchw.shape
    K, P = ksize, padding
    HW = H * W
    assert HW % 128 == 0, "flattened spatial dim must be lane-aligned"

    # Free reshapes (no transposes, no extra HBM pass): NCHW -> (B, C, H*W).
    x2 = x_nchw.reshape(B, C, HW)
    o2 = o_nchw.reshape(B, C, HW)

    # Precomputed {0,1} validity masks per (kh, kw) tap; constant-folded by XLA.
    ll = jnp.arange(HW, dtype=jnp.int32)
    hh, ww = ll // W, ll % W
    masks = []
    for kh in range(K):
        for kw in range(K):
            dh, dw = kh - P, kw - P
            masks.append((hh + dh >= 0) & (hh + dh < H) &
                         (ww + dw >= 0) & (ww + dw < W))
    masks = jnp.stack(masks).astype(jnp.float32)          # (K*K, HW)

    kernel = _make_fused_icm_kernel(H, W, C, K, P)

    edge2, sal2 = pl.pallas_call(
        kernel,
        out_shape=(jax.ShapeDtypeStruct((B, C, HW), jnp.float32),
                   jax.ShapeDtypeStruct((B, C, HW), jnp.float32)),
        grid_spec=pltpu.PrefetchScalarGridSpec(
            num_scalar_prefetch=0,
            grid=(B,),                      # parallel batch axis feeds both
            in_specs=[                      # TensorCores on v7x (B >= 2)
                pl.BlockSpec((1, C, HW), lambda b: (b, 0, 0)),    # x (convs)
                pl.BlockSpec((1, C, HW), lambda b: (b, 0, 0)),    # o (outs)
                pl.BlockSpec((C, K * K * C), lambda b: (0, 0)),   # w_edge
                pl.BlockSpec((C, K * K * C), lambda b: (0, 0)),   # w_sal
                pl.BlockSpec((C, 1), lambda b: (0, 0)),           # b_edge
                pl.BlockSpec((C, 1), lambda b: (0, 0)),           # b_sal
                pl.BlockSpec((K * K, HW), lambda b: (0, 0)),      # masks
            ],
            out_specs=(
                pl.BlockSpec((1, C, HW), lambda b: (b, 0, 0)),    # edge
                pl.BlockSpec((1, C, HW), lambda b: (b, 0, 0)),    # sal
            ),
        ),
        compiler_params=pltpu.CompilerParams(
            dimension_semantics=("parallel",)),
    )(x2, o2, w_edge, w_sal, b_edge, b_sal, masks)

    return edge2.reshape(B, C, H, W), sal2.reshape(B, C, H, W)


def init_icm_params(key, channels, ksizes, paddings):
    """weight_init() semantics: conv weight ~ kaiming_normal(fan_in, relu),
    conv bias = 0, BN gamma = 1, beta = 0, running stats 0/1 (eval mode).
    BN scale is folded into the im2col conv weight matrix."""
    eps = 1e-5
    params = []
    for C, K, P in zip(channels, ksizes, paddings):
        level = {"ksize": K, "padding": P}
        for branch in ("edge", "sal"):
            key, sub = jax.random.split(key)
            fan_in = C * K * K
            std = (2.0 / fan_in) ** 0.5
            w_hwio = std * jax.random.normal(sub, (K, K, C, C), jnp.float32)
            conv_bias = jnp.zeros((C,), jnp.float32)
            gamma = jnp.ones((C,), jnp.float32)
            beta = jnp.zeros((C,), jnp.float32)
            running_mean = jnp.zeros((C,), jnp.float32)
            running_var = jnp.ones((C,), jnp.float32)
            scale = gamma / jnp.sqrt(running_var + eps)             # (C,)
            shift = (conv_bias - running_mean) * scale + beta       # (C,)
            # (Cout, K*K*Cin) weight; row order (kh, kw, cin) matches the
            # in-kernel patch stacking; BN scale folded in.
            w_mat = jnp.transpose(w_hwio, (3, 0, 1, 2)).reshape(C, K * K * C)
            w_mat = w_mat * scale[:, None]
            level[f"{branch}_w_hwio"] = w_hwio          # for pure-JAX reference
            level[f"{branch}_scale"] = scale
            level[f"{branch}_w_mat"] = w_mat
            level[f"{branch}_shift"] = shift.reshape(C, 1)
        params.append(level)
    return params


def icm_forward(params, outs_nchw, convs_nchw):
    """Mirrors ICM.forward. Inputs are lists of 5 NCHW tensors.
    Returns (edge_feature, sal_feature) lists of NCHW tensors."""
    edge_feature, sal_feature = [], []
    for p, out_s, conv_s in zip(params, outs_nchw, convs_nchw):
        edge, sal = icm_level(conv_s, out_s,
                              p["edge_w_mat"], p["sal_w_mat"],
                              p["edge_shift"], p["sal_shift"],
                              ksize=p["ksize"], padding=p["padding"])
        edge_feature.append(edge)
        sal_feature.append(sal)
    return edge_feature, sal_feature


def _ref_branch(x_nchw, o_nchw, w_hwio, scale, shift, padding, combine):
    """Pure-JAX NCHW reference for correctness checking."""
    z = x_nchw * o_nchw if combine == "mul" else x_nchw + o_nchw
    y = jax.lax.conv_general_dilated(
        z, w_hwio, window_strides=(1, 1),
        padding=[(padding, padding), (padding, padding)],
        dimension_numbers=("NCHW", "HWIO", "NCHW"))
    y = y * scale.reshape(1, -1, 1, 1) + shift.reshape(1, -1, 1, 1)
    return jnp.maximum(y, 0.0)


if __name__ == "__main__":
    # Small synthetic config:
    #   list_cvt[1] (channels per level) = [8, 8, 8, 16, 16]
    #   list_para[0] (kernel sizes)      = [3, 3, 3, 5, 5]
    #   list_para[1] (paddings)          = [1, 1, 1, 2, 2]
    channels = [8, 8, 8, 16, 16]
    ksizes = [3, 3, 3, 5, 5]
    paddings = [1, 1, 1, 2, 2]
    B, H, W = 2, 16, 16

    key = jax.random.PRNGKey(0)
    key, pkey = jax.random.split(key)
    params = init_icm_params(pkey, channels, ksizes, paddings)

    outs, convs = [], []
    for C in channels:
        key, k1, k2 = jax.random.split(key, 3)
        outs.append(jax.random.normal(k1, (B, C, H, W), jnp.float32))   # NCHW
        convs.append(jax.random.normal(k2, (B, C, H, W), jnp.float32))  # NCHW

    edge_feature, sal_feature = icm_forward(params, outs, convs)
    jax.block_until_ready(edge_feature)
    jax.block_until_ready(sal_feature)

    # Correctness check against a pure-JAX reference.
    ok = True
    for i, p in enumerate(params):
        ref_e = _ref_branch(convs[i], outs[i], p["edge_w_hwio"],
                            p["edge_scale"], p["edge_shift"],
                            p["padding"], "mul")
        ref_s = _ref_branch(convs[i], outs[i], p["sal_w_hwio"],
                            p["sal_scale"], p["sal_shift"],
                            p["padding"], "add")
        ok &= bool(jnp.allclose(edge_feature[i], ref_e, atol=5e-4, rtol=5e-4))
        ok &= bool(jnp.allclose(sal_feature[i], ref_s, atol=5e-4, rtol=5e-4))

    if ok:
        print("KERNEL_OK")
    else:
        raise SystemExit("mismatch vs reference")
</pallas_src>

<mosaic_0001>
module attributes {stable_mosaic.version = 11 : i64} {
  func.func @kernel(%arg0: i32, %arg1: memref<1x8x256xf32, #tpu.memory_space<vmem>>, %arg2: memref<1x8x256xf32, #tpu.memory_space<vmem>>, %arg3: memref<8x72xf32, #tpu.memory_space<vmem>>, %arg4: memref<8x72xf32, #tpu.memory_space<vmem>>, %arg5: memref<8x1xf32, #tpu.memory_space<vmem>>, %arg6: memref<8x1xf32, #tpu.memory_space<vmem>>, %arg7: memref<9x256xf32, #tpu.memory_space<vmem>>, %arg8: memref<1x8x256xf32, #tpu.memory_space<vmem>>, %arg9: memref<1x8x256xf32, #tpu.memory_space<vmem>>) attributes {dimension_semantics = [#tpu.dimension_semantics<parallel>], iteration_bounds = array<i64: 2>, scalar_prefetch = 0 : i64, scratch_operands = 0 : i64, tpu.core_type = #tpu.core_type<tc>, window_params = [{transform_indices = @transform_0, window_bounds = array<i64: 1, 8, 256>}, {transform_indices = @transform_1, window_bounds = array<i64: 1, 8, 256>}, {pipeline_mode = #tpu.pipeline_mode<synchronous>, transform_indices = @transform_2, window_bounds = array<i64: 8, 72>}, {pipeline_mode = #tpu.pipeline_mode<synchronous>, transform_indices = @transform_3, window_bounds = array<i64: 8, 72>}, {pipeline_mode = #tpu.pipeline_mode<synchronous>, transform_indices = @transform_4, window_bounds = array<i64: 8, 1>}, {pipeline_mode = #tpu.pipeline_mode<synchronous>, transform_indices = @transform_5, window_bounds = array<i64: 8, 1>}, {pipeline_mode = #tpu.pipeline_mode<synchronous>, transform_indices = @transform_6, window_bounds = array<i64: 9, 256>}, {transform_indices = @transform_7, window_bounds = array<i64: 1, 8, 256>}, {transform_indices = @transform_8, window_bounds = array<i64: 1, 8, 256>}]} {
    %c0 = arith.constant 0 : index
    %c0_0 = arith.constant 0 : index
    %c0_1 = arith.constant 0 : index
    %0 = vector.load %arg1[%c0, %c0_0, %c0_1] : memref<1x8x256xf32, #tpu.memory_space<vmem>>, vector<1x8x256xf32>
    %1 = vector.shape_cast %0 : vector<1x8x256xf32> to vector<8x256xf32>
    %c0_2 = arith.constant 0 : index
    %c0_3 = arith.constant 0 : index
    %c0_4 = arith.constant 0 : index
    %2 = vector.load %arg2[%c0_2, %c0_3, %c0_4] : memref<1x8x256xf32, #tpu.memory_space<vmem>>, vector<1x8x256xf32>
    %3 = vector.shape_cast %2 : vector<1x8x256xf32> to vector<8x256xf32>
    %c0_5 = arith.constant 0 : index
    %c0_6 = arith.constant 0 : index
    %4 = vector.load %arg7[%c0_5, %c0_6] : memref<9x256xf32, #tpu.memory_space<vmem>>, vector<9x256xf32>
    %5 = arith.mulf %1, %3 : vector<8x256xf32>
    %c17_i32 = arith.constant 17 : i32
    %6 = tpu.dynamic_rotate %5 by %c17_i32 dim 1 : vector<8x256xf32>, i32 -> vector<8x256xf32>
    %7 = vector.extract_strided_slice %4 {offsets = [0, 0], sizes = [1, 256], strides = [1, 1]} : vector<9x256xf32> to vector<1x256xf32>
    %8 = vector.broadcast %7 : vector<1x256xf32> to vector<8x256xf32>
    %9 = arith.mulf %6, %8 : vector<8x256xf32>
    %c16_i32 = arith.constant 16 : i32
    %10 = tpu.dynamic_rotate %5 by %c16_i32 dim 1 : vector<8x256xf32>, i32 -> vector<8x256xf32>
    %11 = vector.extract_strided_slice %4 {offsets = [1, 0], sizes = [1, 256], strides = [1, 1]} : vector<9x256xf32> to vector<1x256xf32>
    %12 = vector.broadcast %11 : vector<1x256xf32> to vector<8x256xf32>
    %13 = arith.mulf %10, %12 : vector<8x256xf32>
    %c15_i32 = arith.constant 15 : i32
    %14 = tpu.dynamic_rotate %5 by %c15_i32 dim 1 : vector<8x256xf32>, i32 -> vector<8x256xf32>
    %15 = vector.extract_strided_slice %4 {offsets = [2, 0], sizes = [1, 256], strides = [1, 1]} : vector<9x256xf32> to vector<1x256xf32>
    %16 = vector.broadcast %15 : vector<1x256xf32> to vector<8x256xf32>
    %17 = arith.mulf %14, %16 : vector<8x256xf32>
    %c1_i32 = arith.constant 1 : i32
    %18 = tpu.dynamic_rotate %5 by %c1_i32 dim 1 : vector<8x256xf32>, i32 -> vector<8x256xf32>
    %19 = vector.extract_strided_slice %4 {offsets = [3, 0], sizes = [1, 256], strides = [1, 1]} : vector<9x256xf32> to vector<1x256xf32>
    %20 = vector.broadcast %19 : vector<1x256xf32> to vector<8x256xf32>
    %21 = arith.mulf %18, %20 : vector<8x256xf32>
    %22 = vector.extract_strided_slice %4 {offsets = [4, 0], sizes = [1, 256], strides = [1, 1]} : vector<9x256xf32> to vector<1x256xf32>
    %23 = vector.broadcast %22 : vector<1x256xf32> to vector<8x256xf32>
    %24 = arith.mulf %5, %23 : vector<8x256xf32>
    %c255_i32 = arith.constant 255 : i32
    %25 = tpu.dynamic_rotate %5 by %c255_i32 dim 1 : vector<8x256xf32>, i32 -> vector<8x256xf32>
    %26 = vector.extract_strided_slice %4 {offsets = [5, 0], sizes = [1, 256], strides = [1, 1]} : vector<9x256xf32> to vector<1x256xf32>
    %27 = vector.broadcast %26 : vector<1x256xf32> to vector<8x256xf32>
    %28 = arith.mulf %25, %27 : vector<8x256xf32>
    %c241_i32 = arith.constant 241 : i32
    %29 = tpu.dynamic_rotate %5 by %c241_i32 dim 1 : vector<8x256xf32>, i32 -> vector<8x256xf32>
    %30 = vector.extract_strided_slice %4 {offsets = [6, 0], sizes = [1, 256], strides = [1, 1]} : vector<9x256xf32> to vector<1x256xf32>
    %31 = vector.broadcast %30 : vector<1x256xf32> to vector<8x256xf32>
    %32 = arith.mulf %29, %31 : vector<8x256xf32>
    %c240_i32 = arith.constant 240 : i32
    %33 = tpu.dynamic_rotate %5 by %c240_i32 dim 1 : vector<8x256xf32>, i32 -> vector<8x256xf32>
    %34 = vector.extract_strided_slice %4 {offsets = [7, 0], sizes = [1, 256], strides = [1, 1]} : vector<9x256xf32> to vector<1x256xf32>
    %35 = vector.broadcast %34 : vector<1x256xf32> to vector<8x256xf32>
    %36 = arith.mulf %33, %35 : vector<8x256xf32>
    %c239_i32 = arith.constant 239 : i32
    %37 = tpu.dynamic_rotate %5 by %c239_i32 dim 1 : vector<8x256xf32>, i32 -> vector<8x256xf32>
    %38 = vector.extract_strided_slice %4 {offsets = [8, 0], sizes = [1, 256], strides = [1, 1]} : vector<9x256xf32> to vector<1x256xf32>
    %39 = vector.broadcast %38 : vector<1x256xf32> to vector<8x256xf32>
    %40 = arith.mulf %37, %39 : vector<8x256xf32>
    %41 = tpu.concatenate %9, %13, %17, %21, %24, %28, %32, %36, %40 in 0 : vector<8x256xf32>, vector<8x256xf32>, vector<8x256xf32>, vector<8x256xf32>, vector<8x256xf32>, vector<8x256xf32>, vector<8x256xf32>, vector<8x256xf32>, vector<8x256xf32> -> vector<72x256xf32>
    %c0_7 = arith.constant 0 : index
    %c0_8 = arith.constant 0 : index
    %42 = vector.load %arg3[%c0_7, %c0_8] : memref<8x72xf32, #tpu.memory_space<vmem>>, vector<8x72xf32>
    %cst = arith.constant dense<0.000000e+00> : vector<8x256xf32>
    %43 = tpu.matmul %42, %41, %cst {dimension_numbers = #tpu.dot_dimension_numbers<[1], [0], [0], [1], [0, 0, 1, 1], [], []>} : vector<8x72xf32>, vector<72x256xf32>, vector<8x256xf32> -> vector<8x256xf32>
    %c0_9 = arith.constant 0 : index
    %c0_10 = arith.constant 0 : index
    %44 = vector.load %arg5[%c0_9, %c0_10] : memref<8x1xf32, #tpu.memory_space<vmem>>, vector<8x1xf32>
    %45 = vector.broadcast %44 : vector<8x1xf32> to vector<8x256xf32>
    %46 = arith.addf %43, %45 : vector<8x256xf32>
    %cst_11 = arith.constant 0.000000e+00 : f32
    %47 = vector.broadcast %cst_11 : f32 to vector<8x256xf32>
    %48 = arith.maximumf %46, %47 : vector<8x256xf32>
    %c0_12 = arith.constant 0 : index
    %c0_13 = arith.constant 0 : index
    %c0_14 = arith.constant 0 : index
    %49 = vector.load %arg8[%c0_12, %c0_13, %c0_14] : memref<1x8x256xf32, #tpu.memory_space<vmem>>, vector<1x8x256xf32>
    %50 = vector.shape_cast %49 : vector<1x8x256xf32> to vector<8x256xf32>
    %51 = vector.shape_cast %48 : vector<8x256xf32> to vector<1x8x256xf32>
    tpu.vector_store %arg8[%c0_12, %c0_13, %c0_14], %51 {strides = array<i32>} : memref<1x8x256xf32, #tpu.memory_space<vmem>>, vector<1x8x256xf32>,
    %52 = arith.addf %1, %3 : vector<8x256xf32>
    %c17_i32_15 = arith.constant 17 : i32
    %53 = tpu.dynamic_rotate %52 by %c17_i32_15 dim 1 : vector<8x256xf32>, i32 -> vector<8x256xf32>
    %54 = vector.extract_strided_slice %4 {offsets = [0, 0], sizes = [1, 256], strides = [1, 1]} : vector<9x256xf32> to vector<1x256xf32>
    %55 = vector.broadcast %54 : vector<1x256xf32> to vector<8x256xf32>
    %56 = arith.mulf %53, %55 : vector<8x256xf32>
    %c16_i32_16 = arith.constant 16 : i32
    %57 = tpu.dynamic_rotate %52 by %c16_i32_16 dim 1 : vector<8x256xf32>, i32 -> vector<8x256xf32>
    %58 = vector.extract_strided_slice %4 {offsets = [1, 0], sizes = [1, 256], strides = [1, 1]} : vector<9x256xf32> to vector<1x256xf32>
    %59 = vector.broadcast %58 : vector<1x256xf32> to vector<8x256xf32>
    %60 = arith.mulf %57, %59 : vector<8x256xf32>
    %c15_i32_17 = arith.constant 15 : i32
    %61 = tpu.dynamic_rotate %52 by %c15_i32_17 dim 1 : vector<8x256xf32>, i32 -> vector<8x256xf32>
    %62 = vector.extract_strided_slice %4 {offsets = [2, 0], sizes = [1, 256], strides = [1, 1]} : vector<9x256xf32> to vector<1x256xf32>
    %63 = vector.broadcast %62 : vector<1x256xf32> to vector<8x256xf32>
    %64 = arith.mulf %61, %63 : vector<8x256xf32>
    %c1_i32_18 = arith.constant 1 : i32
    %65 = tpu.dynamic_rotate %52 by %c1_i32_18 dim 1 : vector<8x256xf32>, i32 -> vector<8x256xf32>
    %66 = vector.extract_strided_slice %4 {offsets = [3, 0], sizes = [1, 256], strides = [1, 1]} : vector<9x256xf32> to vector<1x256xf32>
    %67 = vector.broadcast %66 : vector<1x256xf32> to vector<8x256xf32>
    %68 = arith.mulf %65, %67 : vector<8x256xf32>
    %69 = vector.extract_strided_slice %4 {offsets = [4, 0], sizes = [1, 256], strides = [1, 1]} : vector<9x256xf32> to vector<1x256xf32>
    %70 = vector.broadcast %69 : vector<1x256xf32> to vector<8x256xf32>
    %71 = arith.mulf %52, %70 : vector<8x256xf32>
    %c255_i32_19 = arith.constant 255 : i32
    %72 = tpu.dynamic_rotate %52 by %c255_i32_19 dim 1 : vector<8x256xf32>, i32 -> vector<8x256xf32>
    %73 = vector.extract_strided_slice %4 {offsets = [5, 0], sizes = [1, 256], strides = [1, 1]} : vector<9x256xf32> to vector<1x256xf32>
    %74 = vector.broadcast %73 : vector<1x256xf32> to vector<8x256xf32>
    %75 = arith.mulf %72, %74 : vector<8x256xf32>
    %c241_i32_20 = arith.constant 241 : i32
    %76 = tpu.dynamic_rotate %52 by %c241_i32_20 dim 1 : vector<8x256xf32>, i32 -> vector<8x256xf32>
    %77 = vector.extract_strided_slice %4 {offsets = [6, 0], sizes = [1, 256], strides = [1, 1]} : vector<9x256xf32> to vector<1x256xf32>
    %78 = vector.broadcast %77 : vector<1x256xf32> to vector<8x256xf32>
    %79 = arith.mulf %76, %78 : vector<8x256xf32>
    %c240_i32_21 = arith.constant 240 : i32
    %80 = tpu.dynamic_rotate %52 by %c240_i32_21 dim 1 : vector<8x256xf32>, i32 -> vector<8x256xf32>
    %81 = vector.extract_strided_slice %4 {offsets = [7, 0], sizes = [1, 256], strides = [1, 1]} : vector<9x256xf32> to vector<1x256xf32>
    %82 = vector.broadcast %81 : vector<1x256xf32> to vector<8x256xf32>
    %83 = arith.mulf %80, %82 : vector<8x256xf32>
    %c239_i32_22 = arith.constant 239 : i32
    %84 = tpu.dynamic_rotate %52 by %c239_i32_22 dim 1 : vector<8x256xf32>, i32 -> vector<8x256xf32>
    %85 = vector.extract_strided_slice %4 {offsets = [8, 0], sizes = [1, 256], strides = [1, 1]} : vector<9x256xf32> to vector<1x256xf32>
    %86 = vector.broadcast %85 : vector<1x256xf32> to vector<8x256xf32>
    %87 = arith.mulf %84, %86 : vector<8x256xf32>
    %88 = tpu.concatenate %56, %60, %64, %68, %71, %75, %79, %83, %87 in 0 : vector<8x256xf32>, vector<8x256xf32>, vector<8x256xf32>, vector<8x256xf32>, vector<8x256xf32>, vector<8x256xf32>, vector<8x256xf32>, vector<8x256xf32>, vector<8x256xf32> -> vector<72x256xf32>
    %c0_23 = arith.constant 0 : index
    %c0_24 = arith.constant 0 : index
    %89 = vector.load %arg4[%c0_23, %c0_24] : memref<8x72xf32, #tpu.memory_space<vmem>>, vector<8x72xf32>
    %cst_25 = arith.constant dense<0.000000e+00> : vector<8x256xf32>
    %90 = tpu.matmul %89, %88, %cst_25 {dimension_numbers = #tpu.dot_dimension_numbers<[1], [0], [0], [1], [0, 0, 1, 1], [], []>} : vector<8x72xf32>, vector<72x256xf32>, vector<8x256xf32> -> vector<8x256xf32>
    %c0_26 = arith.constant 0 : index
    %c0_27 = arith.constant 0 : index
    %91 = vector.load %arg6[%c0_26, %c0_27] : memref<8x1xf32, #tpu.memory_space<vmem>>, vector<8x1xf32>
    %92 = vector.broadcast %91 : vector<8x1xf32> to vector<8x256xf32>
    %93 = arith.addf %90, %92 : vector<8x256xf32>
    %cst_28 = arith.constant 0.000000e+00 : f32
    %94 = vector.broadcast %cst_28 : f32 to vector<8x256xf32>
    %95 = arith.maximumf %93, %94 : vector<8x256xf32>
    %c0_29 = arith.constant 0 : index
    %c0_30 = arith.constant 0 : index
    %c0_31 = arith.constant 0 : index
    %96 = vector.load %arg9[%c0_29, %c0_30, %c0_31] : memref<1x8x256xf32, #tpu.memory_space<vmem>>, vector<1x8x256xf32>
    %97 = vector.shape_cast %96 : vector<1x8x256xf32> to vector<8x256xf32>
    %98 = vector.shape_cast %95 : vector<8x256xf32> to vector<1x8x256xf32>
    tpu.vector_store %arg9[%c0_29, %c0_30, %c0_31], %98 {strides = array<i32>} : memref<1x8x256xf32, #tpu.memory_space<vmem>>, vector<1x8x256xf32>,
    return
  }
  func.func @transform_0(%arg0: i32) -> (i32, i32, i32) {
    %c0_i32 = arith.constant 0 : i32
    %c0_i32_0 = arith.constant 0 : i32
    %c0_i32_1 = arith.constant 0 : i32
    return %arg0, %c0_i32, %c0_i32_0 : i32, i32, i32
  }
  func.func @transform_1(%arg0: i32) -> (i32, i32, i32) {
    %c0_i32 = arith.constant 0 : i32
    %c0_i32_0 = arith.constant 0 : i32
    %c0_i32_1 = arith.constant 0 : i32
    return %arg0, %c0_i32, %c0_i32_0 : i32, i32, i32
  }
  func.func @transform_2(%arg0: i32) -> (i32, i32) {
    %c0_i32 = arith.constant 0 : i32
    %c0_i32_0 = arith.constant 0 : i32
    %c0_i32_1 = arith.constant 0 : i32
    return %c0_i32, %c0_i32_0 : i32, i32
  }
  func.func @transform_3(%arg0: i32) -> (i32, i32) {
    %c0_i32 = arith.constant 0 : i32
    %c0_i32_0 = arith.constant 0 : i32
    %c0_i32_1 = arith.constant 0 : i32
    return %c0_i32, %c0_i32_0 : i32, i32
  }
  func.func @transform_4(%arg0: i32) -> (i32, i32) {
    %c0_i32 = arith.constant 0 : i32
    %c0_i32_0 = arith.constant 0 : i32
    %c0_i32_1 = arith.constant 0 : i32
    return %c0_i32, %c0_i32_0 : i32, i32
  }
  func.func @transform_5(%arg0: i32) -> (i32, i32) {
    %c0_i32 = arith.constant 0 : i32
    %c0_i32_0 = arith.constant 0 : i32
    %c0_i32_1 = arith.constant 0 : i32
    return %c0_i32, %c0_i32_0 : i32, i32
  }
  func.func @transform_6(%arg0: i32) -> (i32, i32) {
    %c0_i32 = arith.constant 0 : i32
    %c0_i32_0 = arith.constant 0 : i32
    %c0_i32_1 = arith.constant 0 : i32
    return %c0_i32, %c0_i32_0 : i32, i32
  }
  func.func @transform_7(%arg0: i32) -> (i32, i32, i32) {
    %c0_i32 = arith.constant 0 : i32
    %c0_i32_0 = arith.constant 0 : i32
    %c0_i32_1 = arith.constant 0 : i32
    return %arg0, %c0_i32, %c0_i32_0 : i32, i32, i32
  }
  func.func @transform_8(%arg0: i32) -> (i32, i32, i32) {
    %c0_i32 = arith.constant 0 : i32
    %c0_i32_0 = arith.constant 0 : i32
    %c0_i32_1 = arith.constant 0 : i32
    return %arg0, %c0_i32, %c0_i32_0 : i32, i32, i32
  }
}

</mosaic_0001>

<llo_original>
// kernel: icm_level.1
$region0: #{icm_level.1}
  #allocation0 [shape = 'u32[]', space=smem, size = 0x4, offset = 0x4, fixed_abs, tag = 'smem constant byte address 0x4 - core index']
  #allocation1 [shape = 'u32[144,128]{1,0:T(1,128)}', space=vmem, size = 0x12000, scoped, tag = 'internal scratch']
  %s0 = inlined_call_operand.vmem [shape: f32[2,8,256], index: 0, kind: input, shape index: {}]
  %s1 = inlined_call_operand.vmem [shape: f32[2,8,256], index: 1, kind: input, shape index: {}]
  %s2 = inlined_call_operand.vmem [shape: f32[8,72], index: 2, kind: input, shape index: {}]
  %s3 = inlined_call_operand.vmem [shape: f32[8,72], index: 3, kind: input, shape index: {}]
  %s4 = inlined_call_operand.vmem [shape: f32[8,1], index: 4, kind: input, shape index: {}]
  %s5 = inlined_call_operand.vmem [shape: f32[8,1], index: 5, kind: input, shape index: {}]
  %s6 = inlined_call_operand.vmem [shape: f32[9,256], index: 6, kind: input, shape index: {}]
  %s7 = inlined_call_operand.vmem [shape: f32[2,8,256], index: 7, kind: output, shape index: {0}]
  %s8 = inlined_call_operand.vmem [shape: f32[2,8,256], index: 8, kind: output, shape index: {1}]
  %9 = xla_tuple %s7, %s8
  %s10 = sld [smem:[#allocation0]]
  $region69: #{icm_level.1} parent=0
    _
  %s12 = ssub.s32 1, %s10
  %s13 = scalar_select 0, %s12, %s10
  loop: start=0, step=1, limit=4
  $region2: #{icm_level.1} parent=0 // loop_pre_header
    _
  $region3: #{icm_level.1} parent=0 // loop_header
    %s15 = sphi 0, %s19
    %p16 = scmp.ge.s32.totalorder %s15, 4
    %s25 = sphi 0, %s27
    %s28 = sphi 0, %s25
    %s29 = sphi 0, %s28
    %s45 = sphi 0, %s29
    %s51 = sphi 0, %s53
    %s54 = sphi 0, %s51
    %s55 = sphi 0, %s54
    %s71 = sphi 0, %s55
    %s75 = sphi 0, %s75
    %s77 = sphi 0, %s75
    %s78 = sphi 0, %s77
    %s92 = sphi 0, %s78
    %s96 = sphi 0, %s96
    %s98 = sphi 0, %s96
    %s99 = sphi 0, %s98
    %s113 = sphi 0, %s99
    %s117 = sphi 0, %s117
    %s119 = sphi 0, %s117
    %s120 = sphi 0, %s119
    %s134 = sphi 0, %s120
    %s138 = sphi 0, %s138
    %s140 = sphi 0, %s138
    %s141 = sphi 0, %s140
    %s155 = sphi 0, %s141
    %s159 = sphi 0, %s159
    %s161 = sphi 0, %s159
    %s162 = sphi 0, %s161
    %s176 = sphi 0, %s162
    %s182 = sphi 0, %s184
    %s185 = sphi 0, %s182
    %s186 = sphi 0, %s185
    %s202 = sphi 0, %s186
    %s208 = sphi 0, %s210
    %s211 = sphi 0, %s208
    %s212 = sphi 0, %s211
    %s228 = sphi 0, %s212
  $region4: #{icm_level.1} parent=0 // loop_header_branch
    %18 = sbr.rel (%p16) target = $region8
  $region5: #{icm_level.1} parent=0 // loop_body
    %s20 = ssub.s32 %s15, 1
    %s21 = ssub.s32 %s15, 2
    %s22 = sadd.s32 %s15, 1
    %s23 = ssub.s32 %s15, %s22
    %p24 = scmp.eq.s32.totalorder %s23, 0
    %s26 = sadd.s32 %s25, 1
    %s27 = scalar_select %p24, %s25, %s26
    %p30 = pneg %p24
    %p31 = scmp.eq.s32.totalorder %s15, 1
    %p32 = por %p30, %p31
    %p33 = scmp.ne.s32.totalorder %s25, %s28
    %p34 = scmp.eq.s32.totalorder %s15, 0
    %p35 = por %p33, %p34
    %p36 = scmp.ne.s32.totalorder %s25, %s28
    %p37 = scmp.eq.s32.totalorder %s20, 1
    %p38 = por %p36, %p37
    %p39 = scmp.ne.s32.totalorder %s28, %s29
    %p40 = scmp.eq.s32.totalorder %s20, 0
    %p41 = por %p39, %p40
    %p42 = scmp.ne.s32.totalorder %s28, %s29
    %p43 = scmp.eq.s32.totalorder %s21, 1
    %p44 = por %p42, %p43
    %p46 = scmp.ne.s32.totalorder %s29, %s45
    %p47 = scmp.eq.s32.totalorder %s21, 0
    %p48 = por %p46, %p47
    %s49 = ssub.s32 %s15, %s22
    %p50 = scmp.eq.s32.totalorder %s49, 0
    %s52 = sadd.s32 %s51, 1
    %s53 = scalar_select %p50, %s51, %s52
    %p56 = pneg %p50
    %p57 = scmp.eq.s32.totalorder %s15, 1
    %p58 = por %p56, %p57
    %p59 = scmp.ne.s32.totalorder %s51, %s54
    %p60 = scmp.eq.s32.totalorder %s15, 0
    %p61 = por %p59, %p60
    %p62 = scmp.ne.s32.totalorder %s51, %s54
    %p63 = scmp.eq.s32.totalorder %s20, 1
    %p64 = por %p62, %p63
    %p65 = scmp.ne.s32.totalorder %s54, %s55
    %p66 = scmp.eq.s32.totalorder %s20, 0
    %p67 = por %p65, %p66
    %p68 = scmp.ne.s32.totalorder %s54, %s55
    %p69 = scmp.eq.s32.totalorder %s21, 1
    %p70 = por %p68, %p69
    %p72 = scmp.ne.s32.totalorder %s55, %s71
    %p73 = scmp.eq.s32.totalorder %s21, 0
    %p74 = por %p72, %p73
    %s76 = sadd.s32 %s75, 1
    %p79 = scmp.eq.s32.totalorder %s15, 1
    %p80 = scmp.ne.s32.totalorder %s75, %s77
    %p81 = scmp.eq.s32.totalorder %s15, 0
    %p82 = por %p80, %p81
    %p83 = scmp.ne.s32.totalorder %s75, %s77
    %p84 = scmp.eq.s32.totalorder %s20, 1
    %p85 = por %p83, %p84
    %p86 = scmp.ne.s32.totalorder %s77, %s78
    %p87 = scmp.eq.s32.totalorder %s20, 0
    %p88 = por %p86, %p87
    %p89 = scmp.ne.s32.totalorder %s77, %s78
    %p90 = scmp.eq.s32.totalorder %s21, 1
    %p91 = por %p89, %p90
    %p93 = scmp.ne.s32.totalorder %s78, %s92
    %p94 = scmp.eq.s32.totalorder %s21, 0
    %p95 = por %p93, %p94
    %s97 = sadd.s32 %s96, 1
    %p100 = scmp.eq.s32.totalorder %s15, 1
    %p101 = scmp.ne.s32.totalorder %s96, %s98
    %p102 = scmp.eq.s32.totalorder %s15, 0
    %p103 = por %p101, %p102
    %p104 = scmp.ne.s32.totalorder %s96, %s98
    %p105 = scmp.eq.s32.totalorder %s20, 1
    %p106 = por %p104, %p105
    %p107 = scmp.ne.s32.totalorder %s98, %s99
    %p108 = scmp.eq.s32.totalorder %s20, 0
    %p109 = por %p107, %p108
    %p110 = scmp.ne.s32.totalorder %s98, %s99
    %p111 = scmp.eq.s32.totalorder %s21, 1
    %p112 = por %p110, %p111
    %p114 = scmp.ne.s32.totalorder %s99, %s113
    %p115 = scmp.eq.s32.totalorder %s21, 0
    %p116 = por %p114, %p115
    %s118 = sadd.s32 %s117, 1
    %p121 = scmp.eq.s32.totalorder %s15, 1
    %p122 = scmp.ne.s32.totalorder %s117, %s119
    %p123 = scmp.eq.s32.totalorder %s15, 0
    %p124 = por %p122, %p123
    %p125 = scmp.ne.s32.totalorder %s117, %s119
    %p126 = scmp.eq.s32.totalorder %s20, 1
    %p127 = por %p125, %p126
    %p128 = scmp.ne.s32.totalorder %s119, %s120
    %p129 = scmp.eq.s32.totalorder %s20, 0
    %p130 = por %p128, %p129
    %p131 = scmp.ne.s32.totalorder %s119, %s120
    %p132 = scmp.eq.s32.totalorder %s21, 1
    %p133 = por %p131, %p132
    %p135 = scmp.ne.s32.totalorder %s120, %s134
    %p136 = scmp.eq.s32.totalorder %s21, 0
    %p137 = por %p135, %p136
    %s139 = sadd.s32 %s138, 1
    %p142 = scmp.eq.s32.totalorder %s15, 1
    %p143 = scmp.ne.s32.totalorder %s138, %s140
    %p144 = scmp.eq.s32.totalorder %s15, 0
    %p145 = por %p143, %p144
    %p146 = scmp.ne.s32.totalorder %s138, %s140
    %p147 = scmp.eq.s32.totalorder %s20, 1
    %p148 = por %p146, %p147
    %p149 = scmp.ne.s32.totalorder %s140, %s141
    %p150 = scmp.eq.s32.totalorder %s20, 0
    %p151 = por %p149, %p150
    %p152 = scmp.ne.s32.totalorder %s140, %s141
    %p153 = scmp.eq.s32.totalorder %s21, 1
    %p154 = por %p152, %p153
    %p156 = scmp.ne.s32.totalorder %s141, %s155
    %p157 = scmp.eq.s32.totalorder %s21, 0
    %p158 = por %p156, %p157
    %s160 = sadd.s32 %s159, 1
    %p163 = scmp.eq.s32.totalorder %s15, 1
    %p164 = scmp.ne.s32.totalorder %s159, %s161
    %p165 = scmp.eq.s32.totalorder %s15, 0
    %p166 = por %p164, %p165
    %p167 = scmp.ne.s32.totalorder %s159, %s161
    %p168 = scmp.eq.s32.totalorder %s20, 1
    %p169 = por %p167, %p168
    %p170 = scmp.ne.s32.totalorder %s161, %s162
    %p171 = scmp.eq.s32.totalorder %s20, 0
    %p172 = por %p170, %p171
    %p173 = scmp.ne.s32.totalorder %s161, %s162
    %p174 = scmp.eq.s32.totalorder %s21, 1
    %p175 = por %p173, %p174
    %p177 = scmp.ne.s32.totalorder %s162, %s176
    %p178 = scmp.eq.s32.totalorder %s21, 0
    %p179 = por %p177, %p178
    %s180 = ssub.s32 %s15, %s22
    %p181 = scmp.eq.s32.totalorder %s180, 0
    %s183 = sadd.s32 %s182, 1
    %s184 = scalar_select %p181, %s182, %s183
    %p187 = pneg %p181
    %p188 = scmp.eq.s32.totalorder %s15, 1
    %p189 = por %p187, %p188
    %p190 = scmp.ne.s32.totalorder %s182, %s185
    %p191 = scmp.eq.s32.totalorder %s15, 0
    %p192 = por %p190, %p191
    %p193 = scmp.ne.s32.totalorder %s182, %s185
    %p194 = scmp.eq.s32.totalorder %s20, 1
    %p195 = por %p193, %p194
    %p196 = scmp.ne.s32.totalorder %s185, %s186
    %p197 = scmp.eq.s32.totalorder %s20, 0
    %p198 = por %p196, %p197
    %p199 = scmp.ne.s32.totalorder %s185, %s186
    %p200 = scmp.eq.s32.totalorder %s21, 1
    %p201 = por %p199, %p200
    %p203 = scmp.ne.s32.totalorder %s186, %s202
    %p204 = scmp.eq.s32.totalorder %s21, 0
    %p205 = por %p203, %p204
    %s206 = ssub.s32 %s15, %s22
    %p207 = scmp.eq.s32.totalorder %s206, 0
    %s209 = sadd.s32 %s208, 1
    %s210 = scalar_select %p207, %s208, %s209
    %p213 = pneg %p207
    %p214 = scmp.eq.s32.totalorder %s15, 1
    %p215 = por %p213, %p214
    %p216 = scmp.ne.s32.totalorder %s208, %s211
    %p217 = scmp.eq.s32.totalorder %s15, 0
    %p218 = por %p216, %p217
    %p219 = scmp.ne.s32.totalorder %s208, %s211
    %p220 = scmp.eq.s32.totalorder %s20, 1
    %p221 = por %p219, %p220
    %p222 = scmp.ne.s32.totalorder %s211, %s212
    %p223 = scmp.eq.s32.totalorder %s20, 0
    %p224 = por %p222, %p223
    %p225 = scmp.ne.s32.totalorder %s211, %s212
    %p226 = scmp.eq.s32.totalorder %s21, 1
    %p227 = por %p225, %p226
    %p229 = scmp.ne.s32.totalorder %s212, %s228
    %p230 = scmp.eq.s32.totalorder %s21, 0
    %p231 = por %p229, %p230
    %p232 = scmp.le.s32.totalorder 1, %s15
    %p233 = scmp.lt.s32.totalorder %s15, 3
    %p234 = pnand %p232, %p233
    %p235 = pneg %p234
    // Predicated region
    $region9: #{icm_level.1} parent=5 // pred_check
      _
    $region10: #{icm_level.1} parent=5 // pred_check_branch
      %237 = sbr.rel (%p234) target = $region12
    $region11: #{icm_level.1} parent=5 // pred_region
      %s238 = ssub.s32 %s15, 1
      // Predicated region
      $region13: #{icm_level.1} parent=11 // pred_check
        %p239 = pneg %p88
      $region14: #{icm_level.1} parent=11 // pred_check_branch
        %241 = sbr.rel (%p239) target = $region16
      $region15: #{icm_level.1} parent=11 // pred_region
        _
      $region16: #{icm_level.1} parent=11 // pred_fallthru
        _
      // Predicated region
      $region17: #{icm_level.1} parent=11 // pred_check
        %p242 = pneg %p109
      $region18: #{icm_level.1} parent=11 // pred_check_branch
        %244 = sbr.rel (%p242) target = $region20
      $region19: #{icm_level.1} parent=11 // pred_region
        _
      $region20: #{icm_level.1} parent=11 // pred_fallthru
        _
      // Predicated region
      $region21: #{icm_level.1} parent=11 // pred_check
        %p245 = pneg %p130
      $region22: #{icm_level.1} parent=11 // pred_check_branch
        %247 = sbr.rel (%p245) target = $region24
      $region23: #{icm_level.1} parent=11 // pred_region
        _
      $region24: #{icm_level.1} parent=11 // pred_fallthru
        _
      // Predicated region
      $region25: #{icm_level.1} parent=11 // pred_check
        %p248 = pneg %p151
      $region26: #{icm_level.1} parent=11 // pred_check_branch
        %250 = sbr.rel (%p248) target = $region28
      $region27: #{icm_level.1} parent=11 // pred_region
        _
      $region28: #{icm_level.1} parent=11 // pred_fallthru
        _
      // Predicated region
      $region29: #{icm_level.1} parent=11 // pred_check
        %p251 = pneg %p172
      $region30: #{icm_level.1} parent=11 // pred_check_branch
        %253 = sbr.rel (%p251) target = $region32
      $region31: #{icm_level.1} parent=11 // pred_region
        _
      $region32: #{icm_level.1} parent=11 // pred_fallthru
        _
    $region12: #{icm_level.1} parent=5 // pred_fallthru
      _
    %p254 = scmp.lt.s32.totalorder %s15, 2
    // Predicated region
    $region33: #{icm_level.1} parent=5 // pred_check
      %p255 = pneg %p254
    $region34: #{icm_level.1} parent=5 // pred_check_branch
      %257 = sbr.rel (%p255) target = $region36
    $region35: #{icm_level.1} parent=5 // pred_region
      // Predicated region
      $region37: #{icm_level.1} parent=35 // pred_check
        %p258 = pneg %p35
      $region38: #{icm_level.1} parent=35 // pred_check_branch
        %260 = sbr.rel (%p258) target = $region40
      $region39: #{icm_level.1} parent=35 // pred_region
        %p261 = scmp.lt.s32.totalorder %s15, 1
        %s262 = scalar_select %p261, %s15, 1
        %s263 = smul.addr %s262, 2
        %s264 = smul.addr %s263, 8
        %s265 = scalar_lea.vmem %s0, %s264
      $region40: #{icm_level.1} parent=35 // pred_fallthru
        _
      // Predicated region
      $region41: #{icm_level.1} parent=35 // pred_check
        %p266 = pneg %p61
      $region42: #{icm_level.1} parent=35 // pred_check_branch
        %268 = sbr.rel (%p266) target = $region44
      $region43: #{icm_level.1} parent=35 // pred_region
        %p269 = scmp.lt.s32.totalorder %s15, 1
        %s270 = scalar_select %p269, %s15, 1
        %s271 = smul.addr %s270, 2
        %s272 = smul.addr %s271, 8
        %s273 = scalar_lea.vmem %s1, %s272
      $region44: #{icm_level.1} parent=35 // pred_fallthru
        _
    $region36: #{icm_level.1} parent=5 // pred_fallthru
      _
    %p274 = scmp.le.s32.totalorder 1, %s15
    %p275 = scmp.lt.s32.totalorder %s15, 3
    %p276 = pnand %p274, %p275
    %p277 = pneg %p276
    // Predicated region
    $region45: #{icm_level.1} parent=5 // pred_check
      _
    $region46: #{icm_level.1} parent=5 // pred_check_branch
      %279 = sbr.rel (%p276) target = $region48
    $region47: #{icm_level.1} parent=5 // pred_region
      %s280 = ssub.s32 %s15, 1
      %p281 = scmp.lt.s32.totalorder %s20, 1
      %s282 = scalar_select %p281, %s20, 1
      %s283 = smul.addr %s282, 2
      %s284 = smul.addr %s283, 8
      %s285 = scalar_lea.vmem %s0, %s284
      %p286 = pneg %p41
      %p287 = pneg %p38
      %p288 = scmp.lt.s32.totalorder %s20, 1
      %s289 = scalar_select %p288, %s20, 1
      %s290 = smul.addr %s289, 2
      %s291 = smul.addr %s290, 8
      %s292 = scalar_lea.vmem %s1, %s291
      %p293 = pneg %p67
      %p294 = pneg %p64
      %p295 = pneg %p88
      %p296 = pneg %p85
      %p297 = pneg %p109
      %p298 = pneg %p106
      %p299 = pneg %p130
      %p300 = pneg %p127
      %p301 = pneg %p151
      %p302 = pneg %p148
      %p303 = pneg %p172
      %p304 = pneg %p169
      %p305 = pneg %p198
      %p306 = pneg %p195
      %p307 = scmp.lt.s32.totalorder %s20, 1
      %s308 = scalar_select %p307, %s20, 1
      %s309 = smul.addr %s308, 2
      %s310 = smul.addr %s309, 8
      %s311 = scalar_lea.vmem %s7, %s310
      %p312 = pneg %p224
      %p313 = pneg %p221
      %p314 = scmp.lt.s32.totalorder %s20, 1
      %s315 = scalar_select %p314, %s20, 1
      %s316 = smul.addr %s315, 2
      %s317 = smul.addr %s316, 8
      %s318 = scalar_lea.vmem %s8, %s317
      %p319 = scmp.lt.s32.totalorder %s20, 1
      %s320 = scalar_select %p319, %s20, 1
      %s321 = smul.addr %s320, 2
      %s322 = smul.addr %s321, 8
      %s323 = scalar_lea.vmem %s0, %s322
      %p324 = scmp.lt.s32.totalorder %s20, 1
      %s325 = scalar_select %p324, %s20, 1
      %s326 = smul.addr %s325, 2
      %s327 = smul.addr %s326, 8
      %s328 = scalar_lea.vmem %s1, %s327
      %p329 = scmp.lt.s32.totalorder %s20, 1
      %s330 = scalar_select %p329, %s20, 1
      %s331 = smul.addr %s330, 2
      %s332 = smul.addr %s331, 8
      %s333 = scalar_lea.vmem %s7, %s332
      %p334 = scmp.lt.s32.totalorder %s20, 1
      %s335 = scalar_select %p334, %s20, 1
      %s336 = smul.addr %s335, 2
      %s337 = smul.addr %s336, 8
      %s338 = scalar_lea.vmem %s8, %s337
      %v339 = vld [vmem:[%s323] sm:$0xff]
      %v340 = vld [vmem:[%s323 + $0x8] sm:$0xff]
      %v341 = vld [vmem:[%s328] sm:$0xff]
      %v342 = vld [vmem:[%s328 + $0x8] sm:$0xff]
      %v343 = vld [vmem:[%s6] sm:$0xff]
      %v344 = vld [vmem:[%s6 + $0x8] sm:$0xff]
      %v345 = vld [vmem:[%s6 + $0x10] sm:$0x1]
      %v346 = vld [vmem:[%s6 + $0x18] sm:$0x1]
      %v347 = vmul.f32 %v339, %v341
      %v348 = vmul.f32 %v340, %v342
      %349 = vrot.lane.b32.xlu0 %v347, 17
      %v350 = vpop.permute.xlu0 %349
      %351 = vrot.lane.b32.xlu0 %v348, 17
      %v352 = vpop.permute.xlu0 %351
      %v353 = vlaneseq
      %v354 = vand.u32 %v353, 127
      %vm355 = vcmp.lt.s32.totalorder %v354, 17
      %v356 = vsel %vm355, %v350, %v352
      %v357 = vsel %vm355, %v352, %v350
      %v358 = vlaneseq
      %v359 = vshrl.u32 %v358, 7
      %v360 = vsub.s32 0, %v359
      %v361 = vrot.slane %v343, %v360
      %v362 = vlaneseq
      %v363 = vshrl.u32 %v362, 7
      %v364 = vsub.s32 0, %v363
      %v365 = vrot.slane %v344, %v364
      %v366 = vmul.f32 %v357, %v361
      %v367 = vmul.f32 %v356, %v365
      %368 = vrot.lane.b32.xlu0 %v347, 16
      %v369 = vpop.permute.xlu0 %368
      %370 = vrot.lane.b32.xlu0 %v348, 16
      %v371 = vpop.permute.xlu0 %370
      %vm372 = vcmp.lt.s32.totalorder %v354, 16
      %v373 = vsel %vm372, %v369, %v371
      %v374 = vsel %vm372, %v371, %v369
      %v375 = vlaneseq
      %v376 = vshrl.u32 %v375, 7
      %v377 = vsub.s32 1, %v376
      %v378 = vrot.slane %v343, %v377
      %v379 = vlaneseq
      %v380 = vshrl.u32 %v379, 7
      %v381 = vsub.s32 1, %v380
      %v382 = vrot.slane %v344, %v381
      %v383 = vmul.f32 %v374, %v378
      %v384 = vmul.f32 %v373, %v382
      %385 = vrot.lane.b32.xlu0 %v347, 15
      %v386 = vpop.permute.xlu0 %385
      %387 = vrot.lane.b32.xlu0 %v348, 15
      %v388 = vpop.permute.xlu0 %387
      %vm389 = vcmp.lt.s32.totalorder %v354, 15
      %v390 = vsel %vm389, %v386, %v388
      %v391 = vsel %vm389, %v388, %v386
      %v392 = vlaneseq
      %v393 = vshrl.u32 %v392, 7
      %v394 = vsub.s32 2, %v393
      %v395 = vrot.slane %v343, %v394
      %v396 = vlaneseq
      %v397 = vshrl.u32 %v396, 7
      %v398 = vsub.s32 2, %v397
      %v399 = vrot.slane %v344, %v398
      %v400 = vmul.f32 %v391, %v395
      %v401 = vmul.f32 %v390, %v399
      %402 = vrot.lane.b32.xlu0 %v347, 1
      %v403 = vpop.permute.xlu0 %402
      %404 = vrot.lane.b32.xlu0 %v348, 1
      %v405 = vpop.permute.xlu0 %404
      %vm406 = vcmp.lt.s32.totalorder %v354, 1
      %v407 = vsel %vm406, %v403, %v405
      %v408 = vsel %vm406, %v405, %v403
      %v409 = vlaneseq
      %v410 = vshrl.u32 %v409, 7
      %v411 = vsub.s32 3, %v410
      %v412 = vrot.slane %v343, %v411
      %v413 = vlaneseq
      %v414 = vshrl.u32 %v413, 7
      %v415 = vsub.s32 3, %v414
      %v416 = vrot.slane %v344, %v415
      %v417 = vmul.f32 %v408, %v412
      %v418 = vmul.f32 %v407, %v416
      %v419 = vlaneseq
      %v420 = vshrl.u32 %v419, 7
      %v421 = vsub.s32 4, %v420
      %v422 = vrot.slane %v343, %v421
      %v423 = vlaneseq
      %v424 = vshrl.u32 %v423, 7
      %v425 = vsub.s32 4, %v424
      %v426 = vrot.slane %v344, %v425
      %v427 = vmul.f32 %v347, %v422
      %v428 = vmul.f32 %v348, %v426
      %429 = vrot.lane.b32.xlu0 %v347, 127
      %v430 = vpop.permute.xlu0 %429
      %431 = vrot.lane.b32.xlu0 %v348, 127
      %v432 = vpop.permute.xlu0 %431
      %vm433 = vcmp.lt.s32.totalorder %v354, 127
      %v434 = vsel %vm433, %v430, %v432
      %v435 = vsel %vm433, %v432, %v430
      %v436 = vlaneseq
      %v437 = vshrl.u32 %v436, 7
      %v438 = vsub.s32 5, %v437
      %v439 = vrot.slane %v343, %v438
      %v440 = vlaneseq
      %v441 = vshrl.u32 %v440, 7
      %v442 = vsub.s32 5, %v441
      %v443 = vrot.slane %v344, %v442
      %v444 = vmul.f32 %v434, %v439
      %v445 = vmul.f32 %v435, %v443
      %446 = vrot.lane.b32.xlu0 %v347, 113
      %v447 = vpop.permute.xlu0 %446
      %448 = vrot.lane.b32.xlu0 %v348, 113
      %v449 = vpop.permute.xlu0 %448
      %vm450 = vcmp.lt.s32.totalorder %v354, 113
      %v451 = vsel %vm450, %v447, %v449
      %v452 = vsel %vm450, %v449, %v447
      %v453 = vlaneseq
      %v454 = vshrl.u32 %v453, 7
      %v455 = vsub.s32 6, %v454
      %v456 = vrot.slane %v343, %v455
      %v457 = vlaneseq
      %v458 = vshrl.u32 %v457, 7
      %v459 = vsub.s32 6, %v458
      %v460 = vrot.slane %v344, %v459
      %v461 = vmul.f32 %v451, %v456
      %v462 = vmul.f32 %v452, %v460
      %463 = vrot.lane.b32.xlu0 %v347, 112
      %v464 = vpop.permute.xlu0 %463
      %465 = vrot.lane.b32.xlu0 %v348, 112
      %v466 = vpop.permute.xlu0 %465
      %vm467 = vcmp.lt.s32.totalorder %v354, 112
      %v468 = vsel %vm467, %v464, %v466
      %v469 = vsel %vm467, %v466, %v464
      %v470 = vlaneseq
      %v471 = vshrl.u32 %v470, 7
      %v472 = vsub.s32 7, %v471
      %v473 = vrot.slane %v343, %v472
      %v474 = vlaneseq
      %v475 = vshrl.u32 %v474, 7
      %v476 = vsub.s32 7, %v475
      %v477 = vrot.slane %v344, %v476
      %v478 = vmul.f32 %v468, %v473
      %v479 = vmul.f32 %v469, %v477
      %480 = vrot.lane.b32.xlu0 %v347, 111
      %v481 = vpop.permute.xlu0 %480
      %482 = vrot.lane.b32.xlu0 %v348, 111
      %v483 = vpop.permute.xlu0 %482
      %vm484 = vcmp.lt.s32.totalorder %v354, 111
      %v485 = vsel %vm484, %v481, %v483
      %v486 = vsel %vm484, %v483, %v481
      %v487 = vlaneseq
      %v488 = vshrl.u32 %v487, 7
      %v489 = vsub.s32 0, %v488
      %v490 = vrot.slane %v345, %v489
      %v491 = vlaneseq
      %v492 = vshrl.u32 %v491, 7
      %v493 = vsub.s32 0, %v492
      %v494 = vrot.slane %v346, %v493
      %v495 = vmul.f32 %v485, %v490
      %v496 = vmul.f32 %v486, %v494
      %v497 = vld [vmem:[%s2] sm:$0xff]
      %v498 = vld [vmem:[%s4] sm:$0xff]
      %500 = vset.pattern.permute.xlu0 0
      %501 = vperm.xlu0 %500, %v498
      %v502 = vpop.permute.xlu0 %501
      %vm504 = vcmask 588800
      %v506 = vsel %vm504, %v497, 0
      %508 = vmatprep.subr.mxu0 %v367
      %509 = vmatpush1.msra.mxu0 %v366
      %510 = vmatprep.subr.mxu0 %v384
      %511 = vmatpush1.msra.mxu0 %v383
      %512 = vmatprep.subr.mxu0 %v401
      %513 = vmatpush1.msra.mxu0 %v400
      %514 = vmatprep.subr.mxu0 %v418
      %515 = vmatpush1.msra.mxu0 %v417
      %516 = vmatprep.subr.mxu0 %v428
      %517 = vmatpush1.msra.mxu0 %v427
      %518 = vmatprep.subr.mxu0 %v445
      %519 = vmatpush1.msra.mxu0 %v444
      %520 = vmatprep.subr.mxu0 %v462
      %521 = vmatpush1.msra.mxu0 %v461
      %522 = vmatprep.subr.mxu0 %v479
      %523 = vmatpush1.msra.mxu0 %v478
      %524 = vmatprep.subr.mxu0 %v496
      %525 = vmatpush1.msra.mxu0 %v495
      %526 = vmatprep.subr.mxu0 0.0
      %527 = vmatpush1.msra.mxu0 0.0
      %528 = vmatprep.subr.mxu0 0.0
      %529 = vmatpush1.msra.mxu0 0.0
      %530 = vmatprep.subr.mxu0 0.0
      %531 = vmatpush1.msra.mxu0 0.0
      %532 = vmatprep.subr.mxu0 0.0
      %533 = vmatpush1.msra.mxu0 0.0
      %534 = vmatprep.subr.mxu0 0.0
      %535 = vmatpush1.msra.mxu0 0.0
      %536 = vmatprep.subr.mxu0 0.0
      %537 = vmatpush1.msra.mxu0 0.0
      %538 = vmatprep.subr.mxu0 0.0
      %539 = vmatpush1.msra.mxu0 0.0
      %540 = vmatprep.subr.mxu0 0.0
      %541 = vmatpush1.msra.mxu0 0.0
      %542 = vmatprep.subr.mxu0 0.0
      %543 = vmatpush1.msra.mxu0 0.0
      %544 = vmatprep.subr.mxu0 0.0
      %545 = vmatpush1.msra.mxu0 0.0
      %546 = vmatprep.subr.mxu0 0.0
      %547 = vmatpush1.msra.mxu0 0.0
      %548 = vmatprep.subr.mxu0 0.0
      %549 = vmatpush1.msra.mxu0 0.0
      %550 = vmatprep.subr.mxu0 0.0
      %551 = vmatpush1.msra.mxu0 0.0
      %552 = vmatprep.subr.mxu0 0.0
      %553 = vmatpush1.msra.mxu0 0.0
      %554 = vmatprep.subr.mxu0 0.0
      %555 = vmatpush1.msra.mxu0 0.0
      %556 = vmatprep.subr.mxu0 0.0
      %557 = vmatpush1.msra.mxu0 0.0
      %558 = vmatprep.subr.mxu0 0.0
      %559 = vmatpush1.msra.mxu0 0.0
      %560 = vmatprep.subr.mxu0 0.0
      %561 = vmatpush1.msra.mxu0 0.0
      %562 = vmatprep.subr.mxu0 0.0
      %563 = vmatpush1.msra.mxu0 0.0
      %564 = vmatprep.subr.mxu0 0.0
      %565 = vmatpush1.msra.mxu0 0.0
      %566 = vmatprep.subr.mxu0 0.0
      %567 = vmatpush1.msra.mxu0 0.0
      %568 = vmatprep.subr.mxu0 0.0
      %569 = vmatpush1.msra.mxu0 0.0
      %570 = vmatprep.subr.mxu0 0.0
      %571 = vmatpush1.msra.mxu0 0.0
      %572 = vmatprep.mubr.f32.mxu0 0.0
      %573 = vmatmul.mubr.f32.gmra.mrb[0].mxu0 %v506
      %v574 = vpop.f32.mrb[0].mxu0
      %v575 = vadd.f32 %v502, %v574
      %v576 = vpop.f32.mrb[0].mxu0
      %v577 = vadd.f32 %v502, %v576
      %578 = vdwg.mxu0
      %v579 = vmax.f32 %v575, 0.0
      %v580 = vmax.f32 %v577, 0.0
      %581 = vst [vmem:[%s333] sm:$0xff] %v579
      %582 = vst [vmem:[%s333 + $0x8] sm:$0xff] %v580
      %v583 = vadd.f32 %v339, %v341
      %v584 = vadd.f32 %v340, %v342
      %585 = vrot.lane.b32.xlu0 %v583, 17
      %v586 = vpop.permute.xlu0 %585
      %587 = vrot.lane.b32.xlu0 %v584, 17
      %v588 = vpop.permute.xlu0 %587
      %v589 = vsel %vm355, %v586, %v588
      %v590 = vsel %vm355, %v588, %v586
      %v591 = vmul.f32 %v590, %v361
      %v592 = vmul.f32 %v589, %v365
      %593 = vrot.lane.b32.xlu0 %v583, 16
      %v594 = vpop.permute.xlu0 %593
      %595 = vrot.lane.b32.xlu0 %v584, 16
      %v596 = vpop.permute.xlu0 %595
      %v597 = vsel %vm372, %v594, %v596
      %v598 = vsel %vm372, %v596, %v594
      %v599 = vmul.f32 %v598, %v378
      %v600 = vmul.f32 %v597, %v382
      %601 = vrot.lane.b32.xlu0 %v583, 15
      %v602 = vpop.permute.xlu0 %601
      %603 = vrot.lane.b32.xlu0 %v584, 15
      %v604 = vpop.permute.xlu0 %603
      %v605 = vsel %vm389, %v602, %v604
      %v606 = vsel %vm389, %v604, %v602
      %v607 = vmul.f32 %v606, %v395
      %v608 = vmul.f32 %v605, %v399
      %609 = vrot.lane.b32.xlu0 %v583, 1
      %v610 = vpop.permute.xlu0 %609
      %611 = vrot.lane.b32.xlu0 %v584, 1
      %v612 = vpop.permute.xlu0 %611
      %v613 = vsel %vm406, %v610, %v612
      %v614 = vsel %vm406, %v612, %v610
      %v615 = vmul.f32 %v614, %v412
      %v616 = vmul.f32 %v613, %v416
      %v617 = vmul.f32 %v583, %v422
      %v618 = vmul.f32 %v584, %v426
      %619 = vrot.lane.b32.xlu0 %v583, 127
      %v620 = vpop.permute.xlu0 %619
      %621 = vrot.lane.b32.xlu0 %v584, 127
      %v622 = vpop.permute.xlu0 %621
      %v623 = vsel %vm433, %v620, %v622
      %v624 = vsel %vm433, %v622, %v620
      %v625 = vmul.f32 %v623, %v439
      %v626 = vmul.f32 %v624, %v443
      %627 = vrot.lane.b32.xlu0 %v583, 113
      %v628 = vpop.permute.xlu0 %627
      %629 = vrot.lane.b32.xlu0 %v584, 113
      %v630 = vpop.permute.xlu0 %629
      %v631 = vsel %vm450, %v628, %v630
      %v632 = vsel %vm450, %v630, %v628
      %v633 = vmul.f32 %v631, %v456
      %v634 = vmul.f32 %v632, %v460
      %635 = vrot.lane.b32.xlu0 %v583, 112
      %v636 = vpop.permute.xlu0 %635
      %637 = vrot.lane.b32.xlu0 %v584, 112
      %v638 = vpop.permute.xlu0 %637
      %v639 = vsel %vm467, %v636, %v638
      %v640 = vsel %vm467, %v638, %v636
      %v641 = vmul.f32 %v639, %v473
      %v642 = vmul.f32 %v640, %v477
      %643 = vrot.lane.b32.xlu0 %v583, 111
      %v644 = vpop.permute.xlu0 %643
      %645 = vrot.lane.b32.xlu0 %v584, 111
      %v646 = vpop.permute.xlu0 %645
      %v647 = vsel %vm484, %v644, %v646
      %v648 = vsel %vm484, %v646, %v644
      %v649 = vmul.f32 %v647, %v490
      %v650 = vmul.f32 %v648, %v494
      %v651 = vld [vmem:[%s3] sm:$0xff]
      %v652 = vld [vmem:[%s5] sm:$0xff]
      %654 = vset.pattern.permute.xlu0 0
      %655 = vperm.xlu0 %654, %v652
      %v656 = vpop.permute.xlu0 %655
      %v659 = vsel %vm504, %v651, 0
      %661 = vmatprep.subr.mxu0 %v592
      %662 = vmatpush1.msra.mxu0 %v591
      %663 = vmatprep.subr.mxu0 %v600
      %664 = vmatpush1.msra.mxu0 %v599
      %665 = vmatprep.subr.mxu0 %v608
      %666 = vmatpush1.msra.mxu0 %v607
      %667 = vmatprep.subr.mxu0 %v616
      %668 = vmatpush1.msra.mxu0 %v615
      %669 = vmatprep.subr.mxu0 %v618
      %670 = vmatpush1.msra.mxu0 %v617
      %671 = vmatprep.subr.mxu0 %v626
      %672 = vmatpush1.msra.mxu0 %v625
      %673 = vmatprep.subr.mxu0 %v634
      %674 = vmatpush1.msra.mxu0 %v633
      %675 = vmatprep.subr.mxu0 %v642
      %676 = vmatpush1.msra.mxu0 %v641
      %677 = vmatprep.subr.mxu0 %v650
      %678 = vmatpush1.msra.mxu0 %v649
      %679 = vmatprep.subr.mxu0 0.0
      %680 = vmatpush1.msra.mxu0 0.0
      %681 = vmatprep.subr.mxu0 0.0
      %682 = vmatpush1.msra.mxu0 0.0
      %683 = vmatprep.subr.mxu0 0.0
      %684 = vmatpush1.msra.mxu0 0.0
      %685 = vmatprep.subr.mxu0 0.0
      %686 = vmatpush1.msra.mxu0 0.0
      %687 = vmatprep.subr.mxu0 0.0
      %688 = vmatpush1.msra.mxu0 0.0
      %689 = vmatprep.subr.mxu0 0.0
      %690 = vmatpush1.msra.mxu0 0.0
      %691 = vmatprep.subr.mxu0 0.0
      %692 = vmatpush1.msra.mxu0 0.0
      %693 = vmatprep.subr.mxu0 0.0
      %694 = vmatpush1.msra.mxu0 0.0
      %695 = vmatprep.subr.mxu0 0.0
      %696 = vmatpush1.msra.mxu0 0.0
      %697 = vmatprep.subr.mxu0 0.0
      %698 = vmatpush1.msra.mxu0 0.0
      %699 = vmatprep.subr.mxu0 0.0
      %700 = vmatpush1.msra.mxu0 0.0
      %701 = vmatprep.subr.mxu0 0.0
      %702 = vmatpush1.msra.mxu0 0.0
      %703 = vmatprep.subr.mxu0 0.0
      %704 = vmatpush1.msra.mxu0 0.0
      %705 = vmatprep.subr.mxu0 0.0
      %706 = vmatpush1.msra.mxu0 0.0
      %707 = vmatprep.subr.mxu0 0.0
      %708 = vmatpush1.msra.mxu0 0.0
      %709 = vmatprep.subr.mxu0 0.0
      %710 = vmatpush1.msra.mxu0 0.0
      %711 = vmatprep.subr.mxu0 0.0
      %712 = vmatpush1.msra.mxu0 0.0
      %713 = vmatprep.subr.mxu0 0.0
      %714 = vmatpush1.msra.mxu0 0.0
      %715 = vmatprep.subr.mxu0 0.0
      %716 = vmatpush1.msra.mxu0 0.0
      %717 = vmatprep.subr.mxu0 0.0
      %718 = vmatpush1.msra.mxu0 0.0
      %719 = vmatprep.subr.mxu0 0.0
      %720 = vmatpush1.msra.mxu0 0.0
      %721 = vmatprep.subr.mxu0 0.0
      %722 = vmatpush1.msra.mxu0 0.0
      %723 = vmatprep.subr.mxu0 0.0
      %724 = vmatpush1.msra.mxu0 0.0
      %725 = vmatprep.mubr.f32.mxu0 0.0
      %726 = vmatmul.mubr.f32.gmra.mrb[0].mxu0 %v659
      %v727 = vpop.f32.mrb[0].mxu0
      %v728 = vadd.f32 %v656, %v727
      %v729 = vpop.f32.mrb[0].mxu0
      %v730 = vadd.f32 %v656, %v729
      %731 = vdwg.mxu0
      %v732 = vmax.f32 %v728, 0.0
      %v733 = vmax.f32 %v730, 0.0
      %734 = vst [vmem:[%s338] sm:$0xff] %v732
      %735 = vst [vmem:[%s338 + $0x8] sm:$0xff] %v733
      %p736 = scmp.lt.s32.totalorder %s20, 1
      %s737 = scalar_select %p736, %s20, 1
      %s738 = smul.addr %s737, 2
      %s739 = smul.addr %s738, 8
      %s740 = scalar_lea.vmem %s7, %s739
      %p741 = scmp.lt.s32.totalorder %s20, 1
      %s742 = scalar_select %p741, %s20, 1
      %s743 = smul.addr %s742, 2
      %s744 = smul.addr %s743, 8
      %s745 = scalar_lea.vmem %s8, %s744
      // Predicated region
      $region49: #{icm_level.1} parent=47 // pred_check
        %p746 = pneg %p195
      $region50: #{icm_level.1} parent=47 // pred_check_branch
        %748 = sbr.rel (%p746) target = $region52
      $region51: #{icm_level.1} parent=47 // pred_region
        _
      $region52: #{icm_level.1} parent=47 // pred_fallthru
        _
      // Predicated region
      $region53: #{icm_level.1} parent=47 // pred_check
        %p749 = pneg %p221
      $region54: #{icm_level.1} parent=47 // pred_check_branch
        %751 = sbr.rel (%p749) target = $region56
      $region55: #{icm_level.1} parent=47 // pred_region
        _
      $region56: #{icm_level.1} parent=47 // pred_fallthru
        _
    $region48: #{icm_level.1} parent=5 // pred_fallthru
      _
    %p752 = scmp.le.s32.totalorder 2, %s15
    // Predicated region
    $region57: #{icm_level.1} parent=5 // pred_check
      %p753 = pneg %p752
    $region58: #{icm_level.1} parent=5 // pred_check_branch
      %755 = sbr.rel (%p753) target = $region60
    $region59: #{icm_level.1} parent=5 // pred_region
      %s756 = ssub.s32 %s15, 2
      // Predicated region
      $region61: #{icm_level.1} parent=59 // pred_check
        %p757 = pneg %p201
      $region62: #{icm_level.1} parent=59 // pred_check_branch
        %759 = sbr.rel (%p757) target = $region64
      $region63: #{icm_level.1} parent=59 // pred_region
        %p760 = scmp.lt.s32.totalorder %s21, 1
        %s761 = scalar_select %p760, %s21, 1
        %s762 = smul.addr %s761, 2
        %s763 = smul.addr %s762, 8
        %s764 = scalar_lea.vmem %s7, %s763
      $region64: #{icm_level.1} parent=59 // pred_fallthru
        _
      // Predicated region
      $region65: #{icm_level.1} parent=59 // pred_check
        %p765 = pneg %p227
      $region66: #{icm_level.1} parent=59 // pred_check_branch
        %767 = sbr.rel (%p765) target = $region68
      $region67: #{icm_level.1} parent=59 // pred_region
        %p768 = scmp.lt.s32.totalorder %s21, 1
        %s769 = scalar_select %p768, %s21, 1
        %s770 = smul.addr %s769, 2
        %s771 = smul.addr %s770, 8
        %s772 = scalar_lea.vmem %s8, %s771
      $region68: #{icm_level.1} parent=59 // pred_fallthru
        _
    $region60: #{icm_level.1} parent=5 // pred_fallthru
      _
  $region6: #{icm_level.1} parent=0 // loop_footer
    %s19 = sadd.s32 1, %s15
  $region7: #{icm_level.1} parent=0 // loop_footer_branch
    %14 = sbr.rel target = $region3
  $region8: #{icm_level.1} parent=0 // loop_exit
    _

</llo_original>
